<compile_context>
chip_gen: v5e
topology: v5e:2x2
jax: 0.10.0
libtpu: 0.0.40
codegen_flags: <defaults>
</compile_context>

<pallas_src>
import functools

import jax
import jax.numpy as jnp
from jax.experimental import pallas as pl
from jax.experimental.pallas import tpu as pltpu


def _round_up(x, m):
    return ((x + m - 1) // m) * m


def _mlp_kernel(x_ref, w1_ref, b1_ref, w2_ref, b2_ref, o_ref):
    # x arrives f32 from HBM; cast to bf16 in-kernel (free VPU pack), accumulate in f32 on MXU.
    x = x_ref[...].astype(jnp.bfloat16)
    h = jnp.dot(x, w1_ref[...], preferred_element_type=jnp.float32) + b1_ref[...]
    h = jnp.maximum(h, 0.1 * h)                       # LeakyReLU(0.1) in f32 (single vmax)
    o = jnp.dot(h.astype(jnp.bfloat16), w2_ref[...],
                preferred_element_type=jnp.float32) + b2_ref[...]
    o_ref[...] = o.astype(o_ref.dtype)


@functools.partial(jax.jit, static_argnames=("tile_b",))
def generate_kernel_forward(d_kernel, w1, b1, w2, b2, *, tile_b=2048):
    """Two matmuls + bias + LeakyReLU in one Pallas kernel, gridded over the batch axis.

    d_kernel: (B, nfeats*4) f32
    w1: (nfeats*4, nfeats), b1: (1, nfeats)
    w2: (nfeats, K*K),      b2: (1, K*K)
    returns (B, K*K) f32
    """
    B, IN = d_kernel.shape
    HID = w1.shape[1]
    out_dim = w2.shape[1]
    HID_PAD = max(_round_up(HID, 128), 128)           # full-width MXU passes (v6e/v7x)
    OUT_PAD = max(_round_up(out_dim, 128), 128)       # lane-dense output width

    # Batch tile: multiple of 8 sublanes; cap so the grid has >=4 steps when B allows it
    # (keeps both v7x TensorCores busy); never exceed tile_b (VMEM double-buffer budget).
    tb = min(tile_b, max(8, _round_up(pl.cdiv(B, 4), 8)))
    grid = (pl.cdiv(B, tb),)                          # ragged last block handled by Pallas

    # Tiny weights: zero-pad HID -> HID_PAD and OUT -> OUT_PAD once per call (under jit).
    # Padded h columns are 0 (w1/b1 pad = 0, leaky(0)=0) so padded w2 rows contribute nothing.
    w1p = jnp.zeros((IN, HID_PAD), jnp.bfloat16).at[:, :HID].set(w1.astype(jnp.bfloat16))
    b1p = jnp.zeros((1, HID_PAD), jnp.float32).at[:, :HID].set(b1.astype(jnp.float32))
    w2p = jnp.zeros((HID_PAD, OUT_PAD), jnp.bfloat16).at[:HID, :out_dim].set(
        w2.astype(jnp.bfloat16))
    b2p = jnp.zeros((1, OUT_PAD), jnp.float32).at[:, :out_dim].set(b2.astype(jnp.float32))

    flops = 2 * B * (IN * HID_PAD + HID_PAD * OUT_PAD)
    bytes_accessed = (B * IN * 4 + B * OUT_PAD * 4              # f32 x in, f32 padded out
                      + IN * HID_PAD * 2 + HID_PAD * OUT_PAD * 2  # bf16 weights (resident)
                      + (HID_PAD + OUT_PAD) * 4)                  # f32 biases

    out = pl.pallas_call(
        _mlp_kernel,
        out_shape=jax.ShapeDtypeStruct((B, OUT_PAD), jnp.float32),
        grid_spec=pltpu.PrefetchScalarGridSpec(
            num_scalar_prefetch=0,
            grid=grid,
            in_specs=[
                pl.BlockSpec((tb, IN), lambda i: (i, 0)),          # x tile (pipelined, f32)
                pl.BlockSpec((IN, HID_PAD), lambda i: (0, 0)),     # weights pinned in VMEM
                pl.BlockSpec((1, HID_PAD), lambda i: (0, 0)),
                pl.BlockSpec((HID_PAD, OUT_PAD), lambda i: (0, 0)),
                pl.BlockSpec((1, OUT_PAD), lambda i: (0, 0)),
            ],
            out_specs=pl.BlockSpec((tb, OUT_PAD), lambda i: (i, 0)),
        ),
        compiler_params=pltpu.CompilerParams(
            dimension_semantics=("parallel",),                     # shard batch across TCs (v7x)
        ),
        cost_estimate=pl.CostEstimate(
            flops=flops, transcendentals=0, bytes_accessed=bytes_accessed),
    )(d_kernel, w1p, b1p, w2p, b2p)

    # Column slice kept only to preserve the module's (B, K*K) output contract; it lives
    # inside the jit so XLA can fuse it into the consumer.
    return out[:, :out_dim]


def init_params(key, nfeats, kernel_size=5, dtype=jnp.float32):
    """Deterministic init mimicking nn.Linear's uniform(-1/sqrt(fan_in), 1/sqrt(fan_in))."""
    k1, k2, k3, k4 = jax.random.split(key, 4)
    in1, out1 = nfeats * 4, nfeats
    in2, out2 = nfeats, kernel_size * kernel_size
    bound1 = 1.0 / (in1 ** 0.5)
    bound2 = 1.0 / (in2 ** 0.5)
    w1 = jax.random.uniform(k1, (in1, out1), dtype, minval=-bound1, maxval=bound1)
    b1 = jax.random.uniform(k2, (1, out1), dtype, minval=-bound1, maxval=bound1)
    w2 = jax.random.uniform(k3, (in2, out2), dtype, minval=-bound2, maxval=bound2)
    b2 = jax.random.uniform(k4, (1, out2), dtype, minval=-bound2, maxval=bound2)
    return w1, b1, w2, b2


def reference_forward(x, w1, b1, w2, b2):
    h = x @ w1 + b1
    h = jnp.where(h > 0, h, 0.1 * h)
    return h @ w2 + b2


if __name__ == "__main__":
    nfeats = 32
    kernel_size = 5

    key = jax.random.PRNGKey(0)
    k_x, k_x2, k_p = jax.random.split(key, 3)
    w1, b1, w2, b2 = init_params(k_p, nfeats, kernel_size)

    # Small case (B=8): single grid step.
    x_small = jax.random.normal(k_x, (8, nfeats * 4), jnp.float32)
    out_small = jax.block_until_ready(generate_kernel_forward(x_small, w1, b1, w2, b2))
    ref_small = reference_forward(x_small, w1, b1, w2, b2)
    assert out_small.shape == (8, kernel_size * kernel_size)
    # bf16 MXU operands -> looser tolerance than pure f32.
    assert jnp.allclose(out_small, ref_small, atol=3e-2, rtol=3e-2), (
        float(jnp.max(jnp.abs(out_small - ref_small))))

    # Gridded case (B=1000): 4 grid steps with a ragged last block (no explicit padding).
    x_big = jax.random.normal(k_x2, (1000, nfeats * 4), jnp.float32)
    out_big = jax.block_until_ready(generate_kernel_forward(x_big, w1, b1, w2, b2))
    ref_big = reference_forward(x_big, w1, b1, w2, b2)
    assert out_big.shape == (1000, kernel_size * kernel_size)
    assert jnp.allclose(out_big, ref_big, atol=3e-2, rtol=3e-2), (
        float(jnp.max(jnp.abs(out_big - ref_big))))

    print("KERNEL_OK")
</pallas_src>

<mosaic_0001>
module attributes {stable_mosaic.version = 11 : i64} {
  func.func @_mlp_kernel(%arg0: i32, %arg1: memref<8x128xf32, #tpu.memory_space<vmem>>, %arg2: memref<128x128xbf16, #tpu.memory_space<vmem>>, %arg3: memref<1x128xf32, #tpu.memory_space<vmem>>, %arg4: memref<128x128xbf16, #tpu.memory_space<vmem>>, %arg5: memref<1x128xf32, #tpu.memory_space<vmem>>, %arg6: memref<8x128xf32, #tpu.memory_space<vmem>>) attributes {dimension_semantics = [#tpu.dimension_semantics<parallel>], iteration_bounds = array<i64: 1>, scalar_prefetch = 0 : i64, scratch_operands = 0 : i64, tpu.core_type = #tpu.core_type<tc>, window_params = [{transform_indices = @transform_0, window_bounds = array<i64: 8, 128>}, {pipeline_mode = #tpu.pipeline_mode<synchronous>, transform_indices = @transform_1, window_bounds = array<i64: 128, 128>}, {pipeline_mode = #tpu.pipeline_mode<synchronous>, transform_indices = @transform_2, window_bounds = array<i64: 1, 128>}, {pipeline_mode = #tpu.pipeline_mode<synchronous>, transform_indices = @transform_3, window_bounds = array<i64: 128, 128>}, {pipeline_mode = #tpu.pipeline_mode<synchronous>, transform_indices = @transform_4, window_bounds = array<i64: 1, 128>}, {transform_indices = @transform_5, window_bounds = array<i64: 8, 128>}]} {
    %c0 = arith.constant 0 : index
    %c0_0 = arith.constant 0 : index
    %0 = vector.load %arg1[%c0, %c0_0] : memref<8x128xf32, #tpu.memory_space<vmem>>, vector<8x128xf32>
    %1 = arith.truncf %0 : vector<8x128xf32> to vector<8x128xbf16>
    %c0_1 = arith.constant 0 : index
    %c0_2 = arith.constant 0 : index
    %2 = vector.load %arg2[%c0_1, %c0_2] : memref<128x128xbf16, #tpu.memory_space<vmem>>, vector<128x128xbf16>
    %cst = arith.constant dense<0.000000e+00> : vector<8x128xf32>
    %3 = tpu.matmul %1, %2, %cst {dimension_numbers = #tpu.dot_dimension_numbers<[1], [0], [0], [1], [0, 0, 1, 1], [], []>} : vector<8x128xbf16>, vector<128x128xbf16>, vector<8x128xf32> -> vector<8x128xf32>
    %c0_3 = arith.constant 0 : index
    %c0_4 = arith.constant 0 : index
    %4 = vector.load %arg3[%c0_3, %c0_4] : memref<1x128xf32, #tpu.memory_space<vmem>>, vector<1x128xf32>
    %5 = vector.broadcast %4 : vector<1x128xf32> to vector<8x128xf32>
    %6 = arith.addf %3, %5 : vector<8x128xf32>
    %cst_5 = arith.constant 1.000000e-01 : f32
    %7 = vector.broadcast %cst_5 : f32 to vector<8x128xf32>
    %8 = arith.mulf %7, %6 : vector<8x128xf32>
    %9 = arith.maximumf %6, %8 : vector<8x128xf32>
    %10 = arith.truncf %9 : vector<8x128xf32> to vector<8x128xbf16>
    %c0_6 = arith.constant 0 : index
    %c0_7 = arith.constant 0 : index
    %11 = vector.load %arg4[%c0_6, %c0_7] : memref<128x128xbf16, #tpu.memory_space<vmem>>, vector<128x128xbf16>
    %cst_8 = arith.constant dense<0.000000e+00> : vector<8x128xf32>
    %12 = tpu.matmul %10, %11, %cst_8 {dimension_numbers = #tpu.dot_dimension_numbers<[1], [0], [0], [1], [0, 0, 1, 1], [], []>} : vector<8x128xbf16>, vector<128x128xbf16>, vector<8x128xf32> -> vector<8x128xf32>
    %c0_9 = arith.constant 0 : index
    %c0_10 = arith.constant 0 : index
    %13 = vector.load %arg5[%c0_9, %c0_10] : memref<1x128xf32, #tpu.memory_space<vmem>>, vector<1x128xf32>
    %14 = vector.broadcast %13 : vector<1x128xf32> to vector<8x128xf32>
    %15 = arith.addf %12, %14 : vector<8x128xf32>
    %c0_11 = arith.constant 0 : index
    %c0_12 = arith.constant 0 : index
    %16 = vector.load %arg6[%c0_11, %c0_12] : memref<8x128xf32, #tpu.memory_space<vmem>>, vector<8x128xf32>
    tpu.vector_store %arg6[%c0_11, %c0_12], %15 {strides = array<i32>} : memref<8x128xf32, #tpu.memory_space<vmem>>, vector<8x128xf32>,
    return
  }
  func.func @transform_0(%arg0: i32) -> (i32, i32) {
    %c0_i32 = arith.constant 0 : i32
    %c0_i32_0 = arith.constant 0 : i32
    return %arg0, %c0_i32 : i32, i32
  }
  func.func @transform_1(%arg0: i32) -> (i32, i32) {
    %c0_i32 = arith.constant 0 : i32
    %c0_i32_0 = arith.constant 0 : i32
    %c0_i32_1 = arith.constant 0 : i32
    return %c0_i32, %c0_i32_0 : i32, i32
  }
  func.func @transform_2(%arg0: i32) -> (i32, i32) {
    %c0_i32 = arith.constant 0 : i32
    %c0_i32_0 = arith.constant 0 : i32
    %c0_i32_1 = arith.constant 0 : i32
    return %c0_i32, %c0_i32_0 : i32, i32
  }
  func.func @transform_3(%arg0: i32) -> (i32, i32) {
    %c0_i32 = arith.constant 0 : i32
    %c0_i32_0 = arith.constant 0 : i32
    %c0_i32_1 = arith.constant 0 : i32
    return %c0_i32, %c0_i32_0 : i32, i32
  }
  func.func @transform_4(%arg0: i32) -> (i32, i32) {
    %c0_i32 = arith.constant 0 : i32
    %c0_i32_0 = arith.constant 0 : i32
    %c0_i32_1 = arith.constant 0 : i32
    return %c0_i32, %c0_i32_0 : i32, i32
  }
  func.func @transform_5(%arg0: i32) -> (i32, i32) {
    %c0_i32 = arith.constant 0 : i32
    %c0_i32_0 = arith.constant 0 : i32
    return %arg0, %c0_i32 : i32, i32
  }
}

</mosaic_0001>

<llo_original>
// kernel: generate_kernel_forward.1
$region0: #{generate_kernel_forward.1}
  #allocation0 [shape = 'u32[]', space=smem, size = 0x4, offset = 0x4, fixed_abs, tag = 'smem constant byte address 0x4 - core index']
  #allocation1 [shape = 'u32[72,128]{1,0:T(1,128)}', space=vmem, size = 0x9000, scoped, tag = 'internal scratch']
  %s0 = inlined_call_operand.vmem [shape: f32[8,128], index: 0, kind: input, shape index: {}]
  %s1 = inlined_call_operand.vmem [shape: bf16[128,128], index: 1, kind: input, shape index: {}]
  %s2 = inlined_call_operand.vmem [shape: f32[1,128], index: 2, kind: input, shape index: {}]
  %s3 = inlined_call_operand.vmem [shape: bf16[128,128], index: 3, kind: input, shape index: {}]
  %s4 = inlined_call_operand.vmem [shape: f32[1,128], index: 4, kind: input, shape index: {}]
  %s5 = inlined_call_operand.hbm [shape: f32[8,128], index: 5, kind: output, shape index: {}]
  %s6 = sld [smem:[#allocation0]]
  $region30: #{generate_kernel_forward.1} parent=0
    _
  %s8 = ssub.s32 1, %s6
  %s9 = scalar_select 0, %s8, %s6
  $region1: #{generate_kernel_forward.1} parent=0
    #allocation2 [shape = 'u8[4096]{0}', space=vmem, size = 0x1000, scoped, tag = 'output window, operand 0, single buffered']
    #allocation3 [shape = 's32[1]{0}', space=sflag, size = 0x4, scoped, tag = 'scoped memory for generate_kernel_forward.1']
    %10 = vsyncpa [#allocation3], 0
    // Predicated region
    $region2: #{generate_kernel_forward.1} parent=1 // pred_check
      _
    $region3: #{generate_kernel_forward.1} parent=1 // pred_check_branch
      %12 = sbr.rel (0) target = $region5
    $region4: #{generate_kernel_forward.1} parent=1 // pred_region
      _
    $region5: #{generate_kernel_forward.1} parent=1 // pred_fallthru
      _
    // Predicated region
    $region6: #{generate_kernel_forward.1} parent=1 // pred_check
      _
    $region7: #{generate_kernel_forward.1} parent=1 // pred_check_branch
      %14 = sbr.rel (0) target = $region9
    $region8: #{generate_kernel_forward.1} parent=1 // pred_region
      _
    $region9: #{generate_kernel_forward.1} parent=1 // pred_fallthru
      _
    // Predicated region
    $region10: #{generate_kernel_forward.1} parent=1 // pred_check
      _
    $region11: #{generate_kernel_forward.1} parent=1 // pred_check_branch
      %16 = sbr.rel (0) target = $region13
    $region12: #{generate_kernel_forward.1} parent=1 // pred_region
      _
    $region13: #{generate_kernel_forward.1} parent=1 // pred_fallthru
      _
    // Predicated region
    $region14: #{generate_kernel_forward.1} parent=1 // pred_check
      _
    $region15: #{generate_kernel_forward.1} parent=1 // pred_check_branch
      %18 = sbr.rel (0) target = $region17
    $region16: #{generate_kernel_forward.1} parent=1 // pred_region
      _
    $region17: #{generate_kernel_forward.1} parent=1 // pred_fallthru
      _
    // Predicated region
    $region18: #{generate_kernel_forward.1} parent=1 // pred_check
      _
    $region19: #{generate_kernel_forward.1} parent=1 // pred_check_branch
      %20 = sbr.rel (0) target = $region21
    $region20: #{generate_kernel_forward.1} parent=1 // pred_region
      _
    $region21: #{generate_kernel_forward.1} parent=1 // pred_fallthru
      _
    %v21 = vld [vmem:[%s0] sm:$0xff]
    %v22 = vpack.c.bf16 %v21, %v21
    %v23 = vld [vmem:[%s1] sm:$0xf]
    %v24 = vld [vmem:[%s1 + $0x4] sm:$0xf]
    %v25 = vld [vmem:[%s1 + $0x8] sm:$0xf]
    %v26 = vld [vmem:[%s1 + $0xc] sm:$0xf]
    %v27 = vld [vmem:[%s1 + $0x10] sm:$0xf]
    %v28 = vld [vmem:[%s1 + $0x14] sm:$0xf]
    %v29 = vld [vmem:[%s1 + $0x18] sm:$0xf]
    %v30 = vld [vmem:[%s1 + $0x1c] sm:$0xf]
    %v31 = vld [vmem:[%s1 + $0x20] sm:$0xf]
    %v32 = vld [vmem:[%s1 + $0x24] sm:$0xf]
    %v33 = vld [vmem:[%s1 + $0x28] sm:$0xf]
    %v34 = vld [vmem:[%s1 + $0x2c] sm:$0xf]
    %v35 = vld [vmem:[%s1 + $0x30] sm:$0xf]
    %v36 = vld [vmem:[%s1 + $0x34] sm:$0xf]
    %v37 = vld [vmem:[%s1 + $0x38] sm:$0xf]
    %v38 = vld [vmem:[%s1 + $0x3c] sm:$0xf]
    %v39 = vld [vmem:[%s2] sm:$0x1]
    %v41 = vperm.slane %v39, 0
    %v59 = vunpack.c.l.b16 %v23
    %v60 = vunpack.c.l.b16 %v24
    %v61 = vunpack.c.l.b16 %v25
    %v62 = vunpack.c.l.b16 %v26
    %v63 = vunpack.c.l.b16 %v27
    %v64 = vunpack.c.l.b16 %v28
    %v65 = vunpack.c.l.b16 %v29
    %v66 = vunpack.c.l.b16 %v30
    %v67 = vunpack.c.l.b16 %v31
    %v68 = vunpack.c.l.b16 %v32
    %v69 = vunpack.c.l.b16 %v33
    %v70 = vunpack.c.l.b16 %v34
    %v71 = vunpack.c.l.b16 %v35
    %v72 = vunpack.c.l.b16 %v36
    %v73 = vunpack.c.l.b16 %v37
    %v74 = vunpack.c.l.b16 %v38
    %v75 = vpack.c.b16 %v60, %v59
    %v76 = vpack.c.b16 %v62, %v61
    %v77 = vpack.c.b16 %v64, %v63
    %v78 = vpack.c.b16 %v66, %v65
    %v79 = vpack.c.b16 %v68, %v67
    %v80 = vpack.c.b16 %v70, %v69
    %v81 = vpack.c.b16 %v72, %v71
    %v82 = vpack.c.b16 %v74, %v73
    %91 = vmatpush.bf16.msra.mxu0 %v82
    %92 = vmatpush.bf16.msra.mxu0 %v81
    %93 = vmatpush.bf16.msra.mxu0 %v80
    %94 = vmatpush.bf16.msra.mxu0 %v79
    %95 = vmatpush.bf16.msra.mxu0 %v78
    %96 = vmatpush.bf16.msra.mxu0 %v77
    %97 = vmatpush.bf16.msra.mxu0 %v76
    %98 = vmatpush.bf16.msra.mxu0 %v75
    %99 = vmatmul.bf16.gmra.mxu0 %v22
    %v100 = vpop.f32.mrf.mxu0
    %v101 = vadd.f32 %v41, %v100
    %v102 = vpop.f32.mrf.mxu0
    %103 = vdwg.mxu0
    %v104 = vmul.f32 %v101, 0.1
    %v105 = vmax.f32 %v101, %v104
    %v106 = vpack.c.bf16 %v105, %v105
    %v107 = vld [vmem:[%s3] sm:$0xf]
    %v108 = vld [vmem:[%s3 + $0x4] sm:$0xf]
    %v109 = vld [vmem:[%s3 + $0x8] sm:$0xf]
    %v110 = vld [vmem:[%s3 + $0xc] sm:$0xf]
    %v111 = vld [vmem:[%s3 + $0x10] sm:$0xf]
    %v112 = vld [vmem:[%s3 + $0x14] sm:$0xf]
    %v113 = vld [vmem:[%s3 + $0x18] sm:$0xf]
    %v114 = vld [vmem:[%s3 + $0x1c] sm:$0xf]
    %v115 = vld [vmem:[%s3 + $0x20] sm:$0xf]
    %v116 = vld [vmem:[%s3 + $0x24] sm:$0xf]
    %v117 = vld [vmem:[%s3 + $0x28] sm:$0xf]
    %v118 = vld [vmem:[%s3 + $0x2c] sm:$0xf]
    %v119 = vld [vmem:[%s3 + $0x30] sm:$0xf]
    %v120 = vld [vmem:[%s3 + $0x34] sm:$0xf]
    %v121 = vld [vmem:[%s3 + $0x38] sm:$0xf]
    %v122 = vld [vmem:[%s3 + $0x3c] sm:$0xf]
    %v123 = vld [vmem:[%s4] sm:$0x1]
    %v125 = vperm.slane %v123, 0
    %v143 = vunpack.c.l.b16 %v107
    %v144 = vunpack.c.l.b16 %v108
    %v145 = vunpack.c.l.b16 %v109
    %v146 = vunpack.c.l.b16 %v110
    %v147 = vunpack.c.l.b16 %v111
    %v148 = vunpack.c.l.b16 %v112
    %v149 = vunpack.c.l.b16 %v113
    %v150 = vunpack.c.l.b16 %v114
    %v151 = vunpack.c.l.b16 %v115
    %v152 = vunpack.c.l.b16 %v116
    %v153 = vunpack.c.l.b16 %v117
    %v154 = vunpack.c.l.b16 %v118
    %v155 = vunpack.c.l.b16 %v119
    %v156 = vunpack.c.l.b16 %v120
    %v157 = vunpack.c.l.b16 %v121
    %v158 = vunpack.c.l.b16 %v122
    %v159 = vpack.c.b16 %v144, %v143
    %v160 = vpack.c.b16 %v146, %v145
    %v161 = vpack.c.b16 %v148, %v147
    %v162 = vpack.c.b16 %v150, %v149
    %v163 = vpack.c.b16 %v152, %v151
    %v164 = vpack.c.b16 %v154, %v153
    %v165 = vpack.c.b16 %v156, %v155
    %v166 = vpack.c.b16 %v158, %v157
    %175 = vmatpush.bf16.msra.mxu0 %v166
    %176 = vmatpush.bf16.msra.mxu0 %v165
    %177 = vmatpush.bf16.msra.mxu0 %v164
    %178 = vmatpush.bf16.msra.mxu0 %v163
    %179 = vmatpush.bf16.msra.mxu0 %v162
    %180 = vmatpush.bf16.msra.mxu0 %v161
    %181 = vmatpush.bf16.msra.mxu0 %v160
    %182 = vmatpush.bf16.msra.mxu0 %v159
    %183 = vmatmul.bf16.gmra.mxu0 %v106
    %v184 = vpop.f32.mrf.mxu0
    %v185 = vadd.f32 %v125, %v184
    %v186 = vpop.f32.mrf.mxu0
    %187 = vdwg.mxu0
    %188 = vst [vmem:[#allocation2] sm:$0xff] %v185
    // Predicated region
    $region22: #{generate_kernel_forward.1} parent=1 // pred_check
      _
    $region23: #{generate_kernel_forward.1} parent=1 // pred_check_branch
      %190 = sbr.rel (0) target = $region25
    $region24: #{generate_kernel_forward.1} parent=1 // pred_region
      %192 = vsyncadd [#allocation3], 0
      %s194 = sshll.u32 [#allocation2], 4
      %s195 = int_to_ptr.vmem [resolvable:$true] %s194
      %s196 = sshll.u32 %s5, 4
      %s197 = int_to_ptr.hbm [resolvable:$true] %s196
      %199 = dma.vmem_to_hbm [thread:$0]  %s195, 128, %s197, [#allocation3]
    $region25: #{generate_kernel_forward.1} parent=1 // pred_fallthru
      _
    // Predicated region
    $region26: #{generate_kernel_forward.1} parent=1 // pred_check
      _
    $region27: #{generate_kernel_forward.1} parent=1 // pred_check_branch
      %201 = sbr.rel (0) target = $region29
    $region28: #{generate_kernel_forward.1} parent=1 // pred_region
      %203 = dma.done [#allocation3], 128
    $region29: #{generate_kernel_forward.1} parent=1 // pred_fallthru
      _
    %204 = vsyncpa [#allocation3], 1

</llo_original>
